<compile_context>
chip_gen: v7x
topology: tpu7x:2x2x1
jax: 0.10.0
libtpu: 0.0.40
codegen_flags: <defaults>
</compile_context>

<pallas_src>
import functools
import math

import jax
import jax.numpy as jnp
from jax.experimental import pallas as pl
from jax.experimental.pallas import tpu as pltpu

LN_EPS = 1e-12
VMEM_LIMIT = 32 * 1024 * 1024  # explicit scoped-VMEM limit (above v5e's 16 MiB default, <= v7x physical)


def _compiler_params(dimension_semantics):
    return pltpu.CompilerParams(dimension_semantics=dimension_semantics,
                                vmem_limit_bytes=VMEM_LIMIT)


def _row_tile(m, max_tile=256):
    """Row (sublane-axis) tile: full array if small, else a 8-multiple divisor."""
    if m <= max_tile:
        return m
    for t in (max_tile, 128, 64, 32, 16, 8):
        if m % t == 0:
            return t
    return m


def _col_tile(n, max_tile=512):
    """Column (lane-axis) tile: full array if small, else a 128-multiple divisor."""
    if n <= max_tile:
        return n
    for t in (max_tile, 384, 256, 128):
        if n % t == 0:
            return t
    return n


def _gelu(x):
    # tanh-approx GELU.  TODO(synk): HF BERT uses erf-GELU (small numerical difference).
    return 0.5 * x * (1.0 + jnp.tanh(0.7978845608028654 * (x + 0.044715 * x * x * x)))


def _layernorm(h, g, b):
    mean = jnp.mean(h, axis=-1, keepdims=True)
    var = jnp.mean((h - mean) ** 2, axis=-1, keepdims=True)
    inv = jax.lax.rsqrt(var + LN_EPS)
    return (h - mean) * inv * g + b


# ------------------------------ Pallas kernels ------------------------------

def _ln_kernel(x_ref, g_ref, b_ref, o_ref):
    """LayerNorm(x) over the last axis (no residual)."""
    o_ref[...] = _layernorm(x_ref[...], g_ref[...], b_ref[...]).astype(o_ref.dtype)


def layernorm(x, gamma, beta):
    M, D = x.shape
    tm = _row_tile(M)
    return pl.pallas_call(
        _ln_kernel,
        out_shape=jax.ShapeDtypeStruct((M, D), jnp.float32),
        grid=(M // tm,),
        in_specs=[pl.BlockSpec((tm, D), lambda i: (i, 0)),
                  pl.BlockSpec((1, D), lambda i: (0, 0)),
                  pl.BlockSpec((1, D), lambda i: (0, 0))],
        out_specs=pl.BlockSpec((tm, D), lambda i: (i, 0)),
        compiler_params=_compiler_params(("parallel",)),
    )(x, gamma.reshape(1, D), beta.reshape(1, D))


def _linear_kernel(x_ref, w_ref, b_ref, o_ref):
    """y = x @ W + b  (used for the fused QKV projection)."""
    y = jnp.dot(x_ref[...], w_ref[...], preferred_element_type=jnp.float32) + b_ref[...]
    o_ref[...] = y.astype(o_ref.dtype)


def linear(x, w, b):
    M, K = x.shape
    N = w.shape[1]
    tm, tn = _row_tile(M), _col_tile(N)
    return pl.pallas_call(
        _linear_kernel,
        out_shape=jax.ShapeDtypeStruct((M, N), jnp.float32),
        grid=(M // tm, N // tn),
        in_specs=[pl.BlockSpec((tm, K), lambda i, j: (i, 0)),
                  pl.BlockSpec((K, tn), lambda i, j: (0, j)),
                  pl.BlockSpec((1, tn), lambda i, j: (0, j))],
        out_specs=pl.BlockSpec((tm, tn), lambda i, j: (i, j)),
        compiler_params=_compiler_params(("parallel", "parallel")),
    )(x, w, b.reshape(1, N))


def _linear_add_ln_kernel(x_ref, w_ref, b_ref, r_ref, g_ref, beta_ref, o_ref):
    """y = LayerNorm(x @ W + b + residual)  — attention output projection + LN1, fused."""
    y = jnp.dot(x_ref[...], w_ref[...], preferred_element_type=jnp.float32)
    y = y + b_ref[...] + r_ref[...]
    o_ref[...] = _layernorm(y, g_ref[...], beta_ref[...]).astype(o_ref.dtype)


def linear_add_layernorm(x, w, b, residual, gamma, beta):
    M, K = x.shape
    N = w.shape[1]
    tm = _row_tile(M)  # LN needs the full feature row -> tile rows only
    return pl.pallas_call(
        _linear_add_ln_kernel,
        out_shape=jax.ShapeDtypeStruct((M, N), jnp.float32),
        grid=(M // tm,),
        in_specs=[pl.BlockSpec((tm, K), lambda i: (i, 0)),
                  pl.BlockSpec((K, N), lambda i: (0, 0)),
                  pl.BlockSpec((1, N), lambda i: (0, 0)),
                  pl.BlockSpec((tm, N), lambda i: (i, 0)),
                  pl.BlockSpec((1, N), lambda i: (0, 0)),
                  pl.BlockSpec((1, N), lambda i: (0, 0))],
        out_specs=pl.BlockSpec((tm, N), lambda i: (i, 0)),
        compiler_params=_compiler_params(("parallel",)),
    )(x, w, b.reshape(1, N), residual, gamma.reshape(1, N), beta.reshape(1, N))


def _ffn_ln_kernel(x_ref, wi_ref, bi_ref, wf_ref, bf_ref, g_ref, beta_ref, o_ref):
    """y = LayerNorm(GELU(x @ Wi + bi) @ Wf + bf + x)  — whole FFN block in one kernel."""
    h = jnp.dot(x_ref[...], wi_ref[...], preferred_element_type=jnp.float32) + bi_ref[...]
    h = _gelu(h)
    y = jnp.dot(h, wf_ref[...], preferred_element_type=jnp.float32) + bf_ref[...] + x_ref[...]
    o_ref[...] = _layernorm(y, g_ref[...], beta_ref[...]).astype(o_ref.dtype)


def ffn_layernorm(x, wi, bi, wf, bf, gamma, beta):
    M, D = x.shape
    I = wi.shape[1]
    tm = _row_tile(M)
    return pl.pallas_call(
        _ffn_ln_kernel,
        out_shape=jax.ShapeDtypeStruct((M, D), jnp.float32),
        grid=(M // tm,),
        in_specs=[pl.BlockSpec((tm, D), lambda i: (i, 0)),
                  pl.BlockSpec((D, I), lambda i: (0, 0)),
                  pl.BlockSpec((1, I), lambda i: (0, 0)),
                  pl.BlockSpec((I, D), lambda i: (0, 0)),
                  pl.BlockSpec((1, D), lambda i: (0, 0)),
                  pl.BlockSpec((1, D), lambda i: (0, 0)),
                  pl.BlockSpec((1, D), lambda i: (0, 0))],
        out_specs=pl.BlockSpec((tm, D), lambda i: (i, 0)),
        compiler_params=_compiler_params(("parallel",)),
    )(x, wi, bi.reshape(1, I), wf, bf.reshape(1, D),
      gamma.reshape(1, D), beta.reshape(1, D))


def _attn_kernel(qkv_ref, m_ref, o_ref, *, num_heads, head_dim, hidden, scale):
    """Multi-head attention for one batch element: heads sliced from the fused QKV block."""
    qkv = qkv_ref[0]                  # (S, 3D)
    mask = m_ref[0]                   # (1, S) additive mask, broadcast over query rows
    outs = []
    for h in range(num_heads):
        lo = h * head_dim
        q = qkv[:, lo:lo + head_dim]
        k = qkv[:, hidden + lo:hidden + lo + head_dim]
        v = qkv[:, 2 * hidden + lo:2 * hidden + lo + head_dim]
        s = jnp.dot(q, k.T, preferred_element_type=jnp.float32) * scale + mask
        s = s - jnp.max(s, axis=-1, keepdims=True)
        p = jnp.exp(s)
        p = p * pl.reciprocal(jnp.sum(p, axis=-1, keepdims=True), approx=True)
        outs.append(jnp.dot(p, v, preferred_element_type=jnp.float32))
    o_ref[0] = jnp.concatenate(outs, axis=-1).astype(o_ref.dtype)


def attention(qkv, mask_add, *, num_heads, head_dim, hidden):
    # qkv: (B, S, 3D);  mask_add: (B, 1, S) additive mask
    B, S, threeD = qkv.shape
    scale = 1.0 / math.sqrt(head_dim)
    return pl.pallas_call(
        functools.partial(_attn_kernel, num_heads=num_heads, head_dim=head_dim,
                          hidden=hidden, scale=scale),
        out_shape=jax.ShapeDtypeStruct((B, S, hidden), jnp.float32),
        grid=(B,),
        in_specs=[pl.BlockSpec((1, S, threeD), lambda b: (b, 0, 0)),
                  pl.BlockSpec((1, 1, S), lambda b: (b, 0, 0))],
        out_specs=pl.BlockSpec((1, S, hidden), lambda b: (b, 0, 0)),
        compiler_params=_compiler_params(("parallel",)),
    )(qkv, mask_add)


def _cls_head_kernel(x_ref, w1_ref, b1_ref, w2_ref, b2_ref, o_ref):
    """logits = ReLU(x @ W1 + b1) @ W2 + b2  (classifier head fused; dims pre-padded to 128)."""
    h = jnp.dot(x_ref[...], w1_ref[...], preferred_element_type=jnp.float32) + b1_ref[...]
    h = jnp.maximum(h, 0.0)
    y = jnp.dot(h, w2_ref[...], preferred_element_type=jnp.float32) + b2_ref[...]
    o_ref[...] = y.astype(o_ref.dtype)


def classifier_head(cls, w1p, b1p, w2p, b2p):
    B, D = cls.shape
    Hp = w1p.shape[1]
    Lp = w2p.shape[1]
    return pl.pallas_call(
        _cls_head_kernel,
        out_shape=jax.ShapeDtypeStruct((B, Lp), jnp.float32),
        grid=(1,),
        in_specs=[pl.BlockSpec((B, D), lambda i: (0, 0)),
                  pl.BlockSpec((D, Hp), lambda i: (0, 0)),
                  pl.BlockSpec((1, Hp), lambda i: (0, 0)),
                  pl.BlockSpec((Hp, Lp), lambda i: (0, 0)),
                  pl.BlockSpec((1, Lp), lambda i: (0, 0))],
        out_specs=pl.BlockSpec((B, Lp), lambda i: (0, 0)),
        compiler_params=_compiler_params(("parallel",)),
    )(cls, w1p, b1p.reshape(1, Hp), w2p, b2p.reshape(1, Lp))


# ------------------------------ Model (glue in plain JAX) ------------------------------

def init_params(key, cfg):
    D, I = cfg["hidden"], cfg["intermediate"]
    H, L = cfg["cls_hidden"], cfg["num_labels"]
    Hp = ((H + 127) // 128) * 128          # pad classifier dims to 128 lanes
    Lp = ((L + 127) // 128) * 128
    std = 0.02
    keys = iter(jax.random.split(key, 128))

    def w(shape):
        return jax.random.normal(next(keys), shape, jnp.float32) * std

    cls_w1 = w((D, H))
    cls_w2 = w((H, L))
    params = {
        "word_emb": w((cfg["vocab"], D)),
        "pos_emb": w((cfg["max_pos"], D)),
        "type_emb": w((cfg["type_vocab"], D)),
        "emb_ln_g": jnp.ones((D,), jnp.float32),
        "emb_ln_b": jnp.zeros((D,), jnp.float32),
        "layers": [],
        # classifier: Linear(D, H) -> ReLU -> Linear(H, L), zero-padded to lane-dense shapes
        "cls_w1": jnp.pad(cls_w1, ((0, 0), (0, Hp - H))),
        "cls_b1": jnp.zeros((Hp,), jnp.float32),
        "cls_w2": jnp.pad(cls_w2, ((0, Hp - H), (0, Lp - L))),
        "cls_b2": jnp.zeros((Lp,), jnp.float32),
    }
    for _ in range(cfg["layers"]):
        wq, wk, wv = w((D, D)), w((D, D)), w((D, D))
        params["layers"].append({
            "wqkv": jnp.concatenate([wq, wk, wv], axis=1),       # fused (D, 3D)
            "bqkv": jnp.zeros((3 * D,), jnp.float32),
            "wo": w((D, D)), "bo": jnp.zeros((D,), jnp.float32),
            "ln1_g": jnp.ones((D,), jnp.float32), "ln1_b": jnp.zeros((D,), jnp.float32),
            "wi": w((D, I)), "bi": jnp.zeros((I,), jnp.float32),
            "wf": w((I, D)), "bf": jnp.zeros((D,), jnp.float32),
            "ln2_g": jnp.ones((D,), jnp.float32), "ln2_b": jnp.zeros((D,), jnp.float32),
        })
    return params


def bert_classifier_forward(params, input_ids, attention_mask, cfg):
    B, S = input_ids.shape
    D, nH, hd = cfg["hidden"], cfg["heads"], cfg["head_dim"]
    M = B * S

    # --- embeddings (table gathers are plain-JAX glue; LayerNorm runs in a kernel) ---
    word = params["word_emb"][input_ids]                            # (B, S, D)
    pos = params["pos_emb"][jnp.arange(S)][None, :, :]              # (1, S, D)
    tok = params["type_emb"][jnp.zeros((B, S), jnp.int32)]          # (B, S, D)
    emb = (word + pos + tok).reshape(M, D)
    h = layernorm(emb, params["emb_ln_g"], params["emb_ln_b"])      # (M, D) — no zero residual

    # extended attention mask kept at (B, 1, S); broadcast per head happens in-kernel
    mask_add = ((1.0 - attention_mask.astype(jnp.float32)) * -1e9).reshape(B, 1, S)

    # TODO(synk): BERT dropout layers are omitted (inference / eval semantics).
    for layer in params["layers"]:
        x2 = h                                                      # (M, D)
        qkv = linear(x2, layer["wqkv"], layer["bqkv"])              # (M, 3D) fused QKV
        ctx = attention(qkv.reshape(B, S, 3 * D), mask_add,
                        num_heads=nH, head_dim=hd, hidden=D)        # (B, S, D)
        h1 = linear_add_layernorm(ctx.reshape(M, D), layer["wo"], layer["bo"],
                                  x2, layer["ln1_g"], layer["ln1_b"])
        h = ffn_layernorm(h1, layer["wi"], layer["bi"], layer["wf"], layer["bf"],
                          layer["ln2_g"], layer["ln2_b"])           # (M, D)

    # outputs[0][:, 0, :] -> [CLS] hidden state
    cls = h.reshape(B, S, D)[:, 0, :]                               # (B, D)

    # classifier head: Linear -> ReLU -> Linear (fused; padded logits sliced off)
    logits_padded = classifier_head(cls, params["cls_w1"], params["cls_b1"],
                                    params["cls_w2"], params["cls_b2"])
    return logits_padded[:, :cfg["num_labels"]]


# ------------------------------ main ------------------------------

if __name__ == "__main__":
    cfg = dict(vocab=128, max_pos=64, type_vocab=2,
               hidden=128, heads=2, head_dim=64, intermediate=256,
               layers=2, cls_hidden=50, num_labels=2)

    key = jax.random.PRNGKey(0)
    kp, kid = jax.random.split(key)
    params = init_params(kp, cfg)

    B, S = 2, 16
    input_ids = jax.random.randint(kid, (B, S), 0, cfg["vocab"], dtype=jnp.int32)
    attention_mask = jnp.ones((B, S), dtype=jnp.int32).at[1, 12:].set(0)  # pad tail of sample 1

    logits = bert_classifier_forward(params, input_ids, attention_mask, cfg)
    jax.block_until_ready(logits)
    assert logits.shape == (B, cfg["num_labels"])
    print("KERNEL_OK")
</pallas_src>

<mosaic_0001>
module attributes {stable_mosaic.version = 11 : i64} {
  func.func @_ln_kernel(%arg0: i32, %arg1: memref<32x128xf32, #tpu.memory_space<vmem>>, %arg2: memref<1x128xf32, #tpu.memory_space<vmem>>, %arg3: memref<1x128xf32, #tpu.memory_space<vmem>>, %arg4: memref<32x128xf32, #tpu.memory_space<vmem>>) attributes {dimension_semantics = [#tpu.dimension_semantics<parallel>], iteration_bounds = array<i64: 1>, scalar_prefetch = 0 : i64, scratch_operands = 0 : i64, tpu.core_type = #tpu.core_type<tc>, window_params = [{transform_indices = @transform_0, window_bounds = array<i64: 32, 128>}, {pipeline_mode = #tpu.pipeline_mode<synchronous>, transform_indices = @transform_1, window_bounds = array<i64: 1, 128>}, {pipeline_mode = #tpu.pipeline_mode<synchronous>, transform_indices = @transform_2, window_bounds = array<i64: 1, 128>}, {transform_indices = @transform_3, window_bounds = array<i64: 32, 128>}]} {
    %c0 = arith.constant 0 : index
    %c0_0 = arith.constant 0 : index
    %0 = vector.load %arg1[%c0, %c0_0] : memref<32x128xf32, #tpu.memory_space<vmem>>, vector<32x128xf32>
    %c0_1 = arith.constant 0 : index
    %c0_2 = arith.constant 0 : index
    %1 = vector.load %arg2[%c0_1, %c0_2] : memref<1x128xf32, #tpu.memory_space<vmem>>, vector<1x128xf32>
    %c0_3 = arith.constant 0 : index
    %c0_4 = arith.constant 0 : index
    %2 = vector.load %arg3[%c0_3, %c0_4] : memref<1x128xf32, #tpu.memory_space<vmem>>, vector<1x128xf32>
    %cst = arith.constant dense<0.000000e+00> : vector<32xf32>
    %3 = vector.multi_reduction <add>, %0, %cst [1] : vector<32x128xf32> to vector<32xf32>
    %4 = vector.shape_cast %3 : vector<32xf32> to vector<32x1xf32>
    %cst_5 = arith.constant 1.280000e+02 : f32
    %5 = vector.broadcast %cst_5 : f32 to vector<32x1xf32>
    %6 = arith.divf %4, %5 : vector<32x1xf32>
    %7 = vector.broadcast %6 : vector<32x1xf32> to vector<32x128xf32>
    %8 = arith.subf %0, %7 : vector<32x128xf32>
    %9 = arith.mulf %8, %8 : vector<32x128xf32>
    %cst_6 = arith.constant dense<0.000000e+00> : vector<32xf32>
    %10 = vector.multi_reduction <add>, %9, %cst_6 [1] : vector<32x128xf32> to vector<32xf32>
    %11 = vector.shape_cast %10 : vector<32xf32> to vector<32x1xf32>
    %cst_7 = arith.constant 1.280000e+02 : f32
    %12 = vector.broadcast %cst_7 : f32 to vector<32x1xf32>
    %13 = arith.divf %11, %12 : vector<32x1xf32>
    %cst_8 = arith.constant 9.99999996E-13 : f32
    %14 = vector.broadcast %cst_8 : f32 to vector<32x1xf32>
    %15 = arith.addf %13, %14 : vector<32x1xf32>
    %16 = math.rsqrt %15 : vector<32x1xf32>
    %17 = vector.broadcast %6 : vector<32x1xf32> to vector<32x128xf32>
    %18 = arith.subf %0, %17 : vector<32x128xf32>
    %19 = vector.broadcast %16 : vector<32x1xf32> to vector<32x128xf32>
    %20 = arith.mulf %18, %19 : vector<32x128xf32>
    %21 = vector.broadcast %1 : vector<1x128xf32> to vector<32x128xf32>
    %22 = arith.mulf %20, %21 : vector<32x128xf32>
    %23 = vector.broadcast %2 : vector<1x128xf32> to vector<32x128xf32>
    %24 = arith.addf %22, %23 : vector<32x128xf32>
    %c0_9 = arith.constant 0 : index
    %c0_10 = arith.constant 0 : index
    %25 = vector.load %arg4[%c0_9, %c0_10] : memref<32x128xf32, #tpu.memory_space<vmem>>, vector<32x128xf32>
    tpu.vector_store %arg4[%c0_9, %c0_10], %24 {strides = array<i32>} : memref<32x128xf32, #tpu.memory_space<vmem>>, vector<32x128xf32>,
    return
  }
  func.func @transform_0(%arg0: i32) -> (i32, i32) {
    %c0_i32 = arith.constant 0 : i32
    %c0_i32_0 = arith.constant 0 : i32
    return %arg0, %c0_i32 : i32, i32
  }
  func.func @transform_1(%arg0: i32) -> (i32, i32) {
    %c0_i32 = arith.constant 0 : i32
    %c0_i32_0 = arith.constant 0 : i32
    %c0_i32_1 = arith.constant 0 : i32
    return %c0_i32, %c0_i32_0 : i32, i32
  }
  func.func @transform_2(%arg0: i32) -> (i32, i32) {
    %c0_i32 = arith.constant 0 : i32
    %c0_i32_0 = arith.constant 0 : i32
    %c0_i32_1 = arith.constant 0 : i32
    return %c0_i32, %c0_i32_0 : i32, i32
  }
  func.func @transform_3(%arg0: i32) -> (i32, i32) {
    %c0_i32 = arith.constant 0 : i32
    %c0_i32_0 = arith.constant 0 : i32
    return %arg0, %c0_i32 : i32, i32
  }
}

</mosaic_0001>

<llo_original>
// kernel: tpu_custom_call.1
$region0: #{tpu_custom_call.1}
  #allocation0 [shape = 'u32[]', space=smem, size = 0x4, offset = 0x4, fixed_abs, tag = 'smem constant byte address 0x4 - core index']
  #allocation1 [shape = 'u32[144,128]{1,0:T(1,128)}', space=vmem, size = 0x12000, scoped, tag = 'internal scratch']
  %s0 = inlined_call_operand.hbm [shape: f32[32,128], index: 0, kind: input, shape index: {}]
  %s1 = inlined_call_operand.vmem [shape: f32[1,128], index: 1, kind: input, shape index: {}]
  %s2 = inlined_call_operand.vmem [shape: f32[1,128], index: 2, kind: input, shape index: {}]
  %s3 = inlined_call_operand.hbm [shape: f32[32,128], index: 3, kind: output, shape index: {}]
  %s4 = sld [smem:[#allocation0]]
  $region26: #{tpu_custom_call.1} parent=0
    _
  %s6 = ssub.s32 1, %s4
  %s7 = scalar_select 0, %s6, %s4
  $region1: #{tpu_custom_call.1} parent=0
    #allocation2 [shape = 'u8[16384]{0}', space=vmem, size = 0x4000, scoped, tag = 'input window, operand 0, single buffered']
    #allocation3 [shape = 's32[1]{0}', space=sflag, size = 0x4, scoped, tag = 'scoped memory for tpu_custom_call.1']
    #allocation4 [shape = 's32[1]{0}', space=sflag, size = 0x4, scoped, tag = 'scoped memory for tpu_custom_call.1']
    #allocation5 [shape = 'u8[16384]{0}', space=vmem, size = 0x4000, scoped, tag = 'output window, operand 0, single buffered']
    %8 = vsyncpa [#allocation3], 0
    %9 = vsyncpa [#allocation4], 0
    // Predicated region
    $region2: #{tpu_custom_call.1} parent=1 // pred_check
      _
    $region3: #{tpu_custom_call.1} parent=1 // pred_check_branch
      %11 = sbr.rel (0) target = $region5
    $region4: #{tpu_custom_call.1} parent=1 // pred_region
      %s13 = ssub.s32 512, 512
      %14 = vsyncadd [#allocation3], %s13
      %s15 = sshll.u32 [#allocation2], 4
      %s16 = int_to_ptr.vmem [resolvable:$true] %s15
      %21 = dma.hbm_to_vmem [thread:$0]  %s0, 512, %s16, [#allocation3], 128, 128, 8
    $region5: #{tpu_custom_call.1} parent=1 // pred_fallthru
      _
    // Predicated region
    $region6: #{tpu_custom_call.1} parent=1 // pred_check
      _
    $region7: #{tpu_custom_call.1} parent=1 // pred_check_branch
      %23 = sbr.rel (0) target = $region9
    $region8: #{tpu_custom_call.1} parent=1 // pred_region
      _
    $region9: #{tpu_custom_call.1} parent=1 // pred_fallthru
      _
    // Predicated region
    $region10: #{tpu_custom_call.1} parent=1 // pred_check
      _
    $region11: #{tpu_custom_call.1} parent=1 // pred_check_branch
      %25 = sbr.rel (0) target = $region13
    $region12: #{tpu_custom_call.1} parent=1 // pred_region
      _
    $region13: #{tpu_custom_call.1} parent=1 // pred_fallthru
      _
    // Predicated region
    $region14: #{tpu_custom_call.1} parent=1 // pred_check
      _
    $region15: #{tpu_custom_call.1} parent=1 // pred_check_branch
      %27 = sbr.rel (0) target = $region17
    $region16: #{tpu_custom_call.1} parent=1 // pred_region
      %28 = dma.done [#allocation3], 512
    $region17: #{tpu_custom_call.1} parent=1 // pred_fallthru
      _
    %v29 = vld [vmem:[#allocation2] sm:$0xff]
    %v30 = vld [vmem:[#allocation2 + $0x8] sm:$0xff]
    %v31 = vld [vmem:[#allocation2 + $0x10] sm:$0xff]
    %v32 = vld [vmem:[#allocation2 + $0x18] sm:$0xff]
    %v33 = vld [vmem:[%s1] sm:$0x1]
    %v34 = vld [vmem:[%s2] sm:$0x1]
    %35 = vadd.xlane.f32.xlu0 %v29
    %v36 = vpop.xlane.xlu0 %35
    %37 = vadd.xlane.f32.xlu0 %v30
    %v38 = vpop.xlane.xlu0 %37
    %39 = vadd.xlane.f32.xlu0 %v31
    %v40 = vpop.xlane.xlu0 %39
    %41 = vadd.xlane.f32.xlu0 %v32
    %v42 = vpop.xlane.xlu0 %41
    %v43 = vrcp.pop 128.0
    %v44 = vmul.f32 %v36, %v43
    %v45 = vmul.f32 %v38, %v43
    %v46 = vmul.f32 %v40, %v43
    %v47 = vmul.f32 %v42, %v43
    %v48 = vsub.f32 %v29, %v44
    %v49 = vsub.f32 %v30, %v45
    %v50 = vsub.f32 %v31, %v46
    %v51 = vsub.f32 %v32, %v47
    %v52 = vmul.f32 %v48, %v48
    %v53 = vmul.f32 %v49, %v49
    %v54 = vmul.f32 %v50, %v50
    %v55 = vmul.f32 %v51, %v51
    %56 = vadd.xlane.f32.xlu0 %v52
    %v57 = vpop.xlane.xlu0 %56
    %58 = vadd.xlane.f32.xlu0 %v53
    %v59 = vpop.xlane.xlu0 %58
    %60 = vadd.xlane.f32.xlu0 %v54
    %v61 = vpop.xlane.xlu0 %60
    %62 = vadd.xlane.f32.xlu0 %v55
    %v63 = vpop.xlane.xlu0 %62
    %v64 = vmul.f32 %v57, %v43
    %v65 = vmul.f32 %v59, %v43
    %v66 = vmul.f32 %v61, %v43
    %v67 = vmul.f32 %v63, %v43
    %v68 = vadd.f32 %v64, 1e-12
    %v69 = vadd.f32 %v65, 1e-12
    %v70 = vadd.f32 %v66, 1e-12
    %v71 = vadd.f32 %v67, 1e-12
    %v72 = vrsqrt.pop %v68
    %v73 = vrsqrt.pop %v69
    %v74 = vrsqrt.pop %v70
    %v75 = vrsqrt.pop %v71
    %v76 = vmul.f32 %v48, %v72
    %v77 = vmul.f32 %v49, %v73
    %v78 = vmul.f32 %v50, %v74
    %v79 = vmul.f32 %v51, %v75
    %v81 = vlaneseq
    %v82 = vshrl.u32 %v81, 7
    %v83 = vsub.s32 0, %v82
    %v84 = vrot.slane %v33, %v83
    %v86 = vmul.f32 %v76, %v84
    %v87 = vmul.f32 %v77, %v84
    %v88 = vmul.f32 %v78, %v84
    %v89 = vmul.f32 %v79, %v84
    %v91 = vlaneseq
    %v92 = vshrl.u32 %v91, 7
    %v93 = vsub.s32 0, %v92
    %v94 = vrot.slane %v34, %v93
    %v96 = vadd.f32 %v86, %v94
    %v97 = vadd.f32 %v87, %v94
    %v98 = vadd.f32 %v88, %v94
    %v99 = vadd.f32 %v89, %v94
    %100 = vst [vmem:[#allocation5] sm:$0xff] %v96
    %101 = vst [vmem:[#allocation5 + $0x8] sm:$0xff] %v97
    %102 = vst [vmem:[#allocation5 + $0x10] sm:$0xff] %v98
    %103 = vst [vmem:[#allocation5 + $0x18] sm:$0xff] %v99
    // Predicated region
    $region18: #{tpu_custom_call.1} parent=1 // pred_check
      _
    $region19: #{tpu_custom_call.1} parent=1 // pred_check_branch
      %105 = sbr.rel (0) target = $region21
    $region20: #{tpu_custom_call.1} parent=1 // pred_region
      %s107 = ssub.s32 512, 512
      %108 = vsyncadd [#allocation4], %s107
      %s109 = sshll.u32 [#allocation5], 4
      %s110 = int_to_ptr.vmem [resolvable:$true] %s109
      %115 = dma.vmem_to_hbm [thread:$0]  %s110, 512, %s3, [#allocation4], 128, 128, 8
    $region21: #{tpu_custom_call.1} parent=1 // pred_fallthru
      _
    // Predicated region
    $region22: #{tpu_custom_call.1} parent=1 // pred_check
      _
    $region23: #{tpu_custom_call.1} parent=1 // pred_check_branch
      %117 = sbr.rel (0) target = $region25
    $region24: #{tpu_custom_call.1} parent=1 // pred_region
      %118 = dma.done [#allocation4], 512
    $region25: #{tpu_custom_call.1} parent=1 // pred_fallthru
      _
    %119 = vsyncpa [#allocation3], 1
    %120 = vsyncpa [#allocation4], 1

</llo_original>
